<compile_context>
chip_gen: v7x
topology: tpu7x:2x2x1
jax: 0.10.0
libtpu: 0.0.40
codegen_flags: <defaults>
</compile_context>

<pallas_src>
import functools

import jax
import jax.numpy as jnp
import numpy as np
from jax.experimental import pallas as pl
from jax.experimental.pallas import tpu as pltpu


def _cdiv(a, b):
    return -(-a // b)


def _vmem_limit(block_bytes):
    # Double-buffered input + tiny scratch; keep within v7x's 64 MiB physical
    # VMEM while raising v5e's 16 MiB default scoped limit.
    return int(min(64 << 20, max(32 << 20, 3 * block_bytes)))


# ----------------------------------------------------------------------------
# Flat (lane-dense) path: small images, each image = one row of length H*W.
# ----------------------------------------------------------------------------
def _tv_flat_kernel(x_ref, out_ref, *, img_h, img_w, n_img, g, mask_pad):
    hw = img_h * img_w
    x = x_ref[...].astype(jnp.float32)                        # (g, hw)

    if mask_pad:
        # Zero padded images once (select semantics: OOB NaN/Inf cannot leak).
        blk = pl.program_id(0)
        row = jax.lax.broadcasted_iota(jnp.int32, (g, 1), 0)
        x = jnp.where(blk * g + row < n_img, x, 0.0)

    h_sum = jnp.zeros((1, 1), jnp.float32)
    w_sum = jnp.zeros((1, 1), jnp.float32)

    if img_w > 1:
        # Flat neighbours (k, k+1) are horizontal neighbours unless k is the
        # last column of an image row (convention-free, no roll needed).
        d = x[:, 1:] - x[:, :-1]                               # (g, hw-1)
        lane = jax.lax.broadcasted_iota(jnp.int32, (1, hw - 1), 1)
        w_sum = jnp.sum(jnp.where(lane % img_w != img_w - 1, d * d, 0.0),
                        keepdims=True)
    if img_h > 1:
        # Flat neighbours (k, k+W) are always valid vertical neighbours.
        d = x[:, img_w:] - x[:, : hw - img_w]                  # (g, hw-W)
        h_sum = jnp.sum(d * d, keepdims=True)

    sel = jax.lax.broadcasted_iota(jnp.int32, (1, 2), 1) == 0
    out_ref[0] = jnp.where(sel, h_sum, w_sum)                  # (1, 2)


def _pick_img_block(n_img, hw, itemsize, target_bytes=4 << 20):
    g = max(1, target_bytes // max(1, hw * itemsize))
    if g >= n_img:
        return n_img                       # full dim -> always a legal block
    return max(8, (g // 8) * 8)            # multiple of 8; padded tail is masked


def _tv_flat(xr, img_h, img_w):
    n_img, hw = xr.shape
    itemsize = xr.dtype.itemsize
    g = _pick_img_block(n_img, hw, itemsize)
    n_blk = _cdiv(n_img, g)
    block_bytes = g * hw * itemsize
    kernel = functools.partial(
        _tv_flat_kernel, img_h=img_h, img_w=img_w, n_img=n_img, g=g,
        mask_pad=(n_blk * g > n_img))
    cost = pl.CostEstimate(
        flops=6 * n_img * hw, transcendentals=0,
        bytes_accessed=n_img * hw * itemsize + 8 * n_blk)
    return pl.pallas_call(
        kernel,
        out_shape=jax.ShapeDtypeStruct((n_blk, 1, 2), jnp.float32),
        grid_spec=pltpu.PrefetchScalarGridSpec(
            num_scalar_prefetch=0,
            grid=(n_blk,),
            in_specs=[pl.BlockSpec((g, hw), lambda i: (i, 0))],
            out_specs=pl.BlockSpec((1, 1, 2), lambda i: (i, 0, 0)),
        ),
        compiler_params=pltpu.CompilerParams(
            dimension_semantics=("parallel",),
            vmem_limit_bytes=_vmem_limit(block_bytes)),
        cost_estimate=cost,
    )(xr)


# ----------------------------------------------------------------------------
# Row-slab path: grid = (image [parallel], row-slab [arbitrary]).
# ----------------------------------------------------------------------------
def _tv_slab_kernel(x_ref, out_ref, acc_h, acc_w, prev_row,
                    *, img_w, th, n_j, last_rows):
    j = pl.program_id(1)
    x = x_ref[0].astype(jnp.float32)                           # (th, img_w)

    @pl.when(j == 0)
    def _():
        acc_h[...] = jnp.zeros_like(acc_h)
        acc_w[...] = jnp.zeros_like(acc_w)
        # "Row above row 0" := row 0 -> zero seam contribution for slab 0.
        prev_row[...] = x[0:1, :]

    if n_j > 1:
        @pl.when(j < n_j - 1)
        def _():
            # Steady state: full, fully in-bounds slab. No per-element masks.
            # pltpu.roll is a rotation; the wrap terms are subtracted back out
            # exactly below, so either rotation convention is correct.
            dw = pltpu.roll(x, 1, axis=1) - x                  # lane shift (XLU)
            dv = x - pltpu.roll(x, 1, axis=0)                  # sublane shift (XLU)
            acc_w[...] += jnp.sum(dw * dw, axis=0, keepdims=True)
            acc_h[...] += jnp.sum(dv * dv, axis=0, keepdims=True)

            # Remove the horizontal wrap column: sum_r (x[r,0]-x[r,W-1])^2.
            if img_w > 1:
                wrap_w = x[:, 0:1] - x[:, img_w - 1:img_w]     # (th, 1)
                acc_w[0:1, 0:1] = acc_w[0:1, 0:1] - jnp.sum(
                    wrap_w * wrap_w, keepdims=True)

            # Replace the vertical wrap row with the true inter-slab seam.
            x0 = x[0:1, :]
            xl = x[th - 1:th, :]
            seam = x0 - prev_row[...]
            wrap_v = x0 - xl
            acc_h[...] += seam * seam - wrap_v * wrap_v
            prev_row[...] = xl

    @pl.when(j == n_j - 1)
    def _():
        # Epilogue (last, possibly ragged slab): only `last_rows` rows are in
        # bounds, so use *static* slices -> mask-free, OOB garbage never used.
        xv = x[:last_rows, :]
        w_ep = jnp.zeros((1, 1), jnp.float32)
        h_ep = jnp.zeros((1, 1), jnp.float32)
        if img_w > 1:
            dw = xv[:, 1:] - xv[:, :-1]
            w_ep = jnp.sum(dw * dw, keepdims=True)
        if last_rows > 1:
            dv = xv[1:, :] - xv[: last_rows - 1, :]
            h_ep = h_ep + jnp.sum(dv * dv, keepdims=True)
        if n_j > 1:
            seam = xv[0:1, :] - prev_row[...]
            h_ep = h_ep + jnp.sum(seam * seam, keepdims=True)

        h_tot = jnp.sum(acc_h[...], keepdims=True) + h_ep
        w_tot = jnp.sum(acc_w[...], keepdims=True) + w_ep
        sel = jax.lax.broadcasted_iota(jnp.int32, (1, 2), 1) == 0
        out_ref[0] = jnp.where(sel, h_tot, w_tot)              # (1, 2)


def _pick_row_block(img_h, img_w, itemsize, target_bytes=4 << 20, max_rows=4096):
    rows = target_bytes // max(1, img_w * itemsize)
    rows = max(8, min(max_rows, (rows // 8) * 8))
    return img_h if rows >= img_h else rows


def _tv_slab(xr, img_h, img_w, row_block):
    n_img = xr.shape[0]
    itemsize = xr.dtype.itemsize
    th = row_block if row_block is not None else _pick_row_block(
        img_h, img_w, itemsize)
    th = min(th, img_h)
    assert th == img_h or th % 8 == 0, "row_block must be a multiple of 8 or H"
    n_j = _cdiv(img_h, th)
    last_rows = img_h - (n_j - 1) * th
    block_bytes = th * img_w * itemsize
    kernel = functools.partial(
        _tv_slab_kernel, img_w=img_w, th=th, n_j=n_j, last_rows=last_rows)
    cost = pl.CostEstimate(
        flops=7 * n_img * img_h * img_w, transcendentals=0,
        bytes_accessed=n_img * img_h * img_w * itemsize + 8 * n_img)
    # TODO(synk): when n_img == 1 on v7x, add a second parallel axis (split W
    # with a seam column, or split the row range) so both TensorCores get work.
    # TODO(synk): narrow-but-tall images (W < 128, H*W large) currently take
    # this path and waste lanes; a lane-dense repack per row-chunk would help.
    return pl.pallas_call(
        kernel,
        out_shape=jax.ShapeDtypeStruct((n_img, 1, 2), jnp.float32),
        grid_spec=pltpu.PrefetchScalarGridSpec(
            num_scalar_prefetch=0,
            grid=(n_img, n_j),
            in_specs=[pl.BlockSpec((1, th, img_w), lambda i, j: (i, j, 0))],
            out_specs=pl.BlockSpec((1, 1, 2), lambda i, j: (i, 0, 0)),
            scratch_shapes=[pltpu.VMEM((1, img_w), jnp.float32),   # acc_h
                            pltpu.VMEM((1, img_w), jnp.float32),   # acc_w
                            pltpu.VMEM((1, img_w), jnp.float32)],  # prev_row
        ),
        compiler_params=pltpu.CompilerParams(
            dimension_semantics=("parallel", "arbitrary"),
            vmem_limit_bytes=_vmem_limit(block_bytes)),
        cost_estimate=cost,
    )(xr)


# ----------------------------------------------------------------------------
# Public wrapper (PyTorch TVLoss.forward equivalent).
# ----------------------------------------------------------------------------
def tv_loss(x, weight=1.0, *, row_block=None, flat_max_elems=65536):
    b, c, h, w = x.shape
    n_img = b * c
    use_flat = (w < 128) and (h * w <= flat_max_elems) and (row_block is None)
    if use_flat:
        parts = _tv_flat(x.reshape(n_img, h * w), h, w)
    else:
        parts = _tv_slab(x.reshape(n_img, h, w), h, w, row_block)

    h_tv = jnp.sum(parts[..., 0])
    w_tv = jnp.sum(parts[..., 1])
    count_h = c * (h - 1) * w
    count_w = c * h * (w - 1)
    # Note: like the PyTorch module, this divides by zero when h == 1 or w == 1.
    return weight * 2.0 * (h_tv / count_h + w_tv / count_w) / b


def _tv_loss_ref(x, weight=1.0):
    b, c, h, w = x.shape
    count_h = c * (h - 1) * w
    count_w = c * h * (w - 1)
    h_tv = jnp.sum((x[:, :, 1:, :] - x[:, :, : h - 1, :]) ** 2)
    w_tv = jnp.sum((x[:, :, :, 1:] - x[:, :, :, : w - 1]) ** 2)
    return weight * 2.0 * (h_tv / count_h + w_tv / count_w) / b


if __name__ == "__main__":
    key = jax.random.PRNGKey(0)
    k1, k2, k3 = jax.random.split(key, 3)

    # Flat (lane-dense) path: NCHW = (2, 4, 16, 16).
    x1 = jax.random.normal(k1, (2, 4, 16, 16), dtype=jnp.float32)
    out1 = jax.block_until_ready(tv_loss(x1, weight=1.0))
    ref1 = _tv_loss_ref(x1, weight=1.0)
    np.testing.assert_allclose(np.asarray(out1), np.asarray(ref1),
                               rtol=1e-4, atol=1e-5)

    # Slab path, forced small row blocks: steady slabs + seams + ragged last slab.
    x2 = jax.random.normal(k2, (1, 2, 20, 128), dtype=jnp.float32)
    out2 = jax.block_until_ready(tv_loss(x2, weight=0.5, row_block=8))
    ref2 = _tv_loss_ref(x2, weight=0.5)
    np.testing.assert_allclose(np.asarray(out2), np.asarray(ref2),
                               rtol=1e-4, atol=1e-5)

    # Slab path, single-slab configuration (auto row block = full height).
    out3 = jax.block_until_ready(tv_loss(x2, weight=1.0))
    ref3 = _tv_loss_ref(x2, weight=1.0)
    np.testing.assert_allclose(np.asarray(out3), np.asarray(ref3),
                               rtol=1e-4, atol=1e-5)

    # Slab path, evenly divisible slabs, several images on the parallel axis.
    x3 = jax.random.normal(k3, (2, 3, 48, 384), dtype=jnp.float32)
    out4 = jax.block_until_ready(tv_loss(x3, weight=2.0, row_block=16))
    ref4 = _tv_loss_ref(x3, weight=2.0)
    np.testing.assert_allclose(np.asarray(out4), np.asarray(ref4),
                               rtol=1e-4, atol=1e-5)

    print("KERNEL_OK")
</pallas_src>

<mosaic_0001>
module attributes {stable_mosaic.version = 11 : i64} {
  func.func @_tv_flat_kernel(%arg0: i32, %arg1: memref<8x256xf32, #tpu.memory_space<vmem>>, %arg2: memref<1x1x2xf32, #tpu.memory_space<vmem>>) attributes {dimension_semantics = [#tpu.dimension_semantics<parallel>], iteration_bounds = array<i64: 1>, scalar_prefetch = 0 : i64, scratch_operands = 0 : i64, tpu.core_type = #tpu.core_type<tc>, window_params = [{transform_indices = @transform_0, window_bounds = array<i64: 8, 256>}, {transform_indices = @transform_1, window_bounds = array<i64: 1, 1, 2>}]} {
    %c0 = arith.constant 0 : index
    %c0_0 = arith.constant 0 : index
    %0 = vector.load %arg1[%c0, %c0_0] : memref<8x256xf32, #tpu.memory_space<vmem>>, vector<8x256xf32>
    %1 = vector.extract_strided_slice %0 {offsets = [0, 1], sizes = [8, 255], strides = [1, 1]} : vector<8x256xf32> to vector<8x255xf32>
    %2 = vector.extract_strided_slice %0 {offsets = [0, 0], sizes = [8, 255], strides = [1, 1]} : vector<8x256xf32> to vector<8x255xf32>
    %3 = arith.subf %1, %2 : vector<8x255xf32>
    %4 = tpu.iota {dimensions = array<i32: 1>} : vector<1x255xi32>
    %c16_i32 = arith.constant 16 : i32
    %c0_i32 = arith.constant 0 : i32
    %5 = arith.cmpi eq, %c16_i32, %c0_i32 : i32
    %c1_i32 = arith.constant 1 : i32
    %6 = arith.select %5, %c1_i32, %c16_i32 : i32
    %7 = vector.broadcast %6 : i32 to vector<1x255xi32>
    %8 = arith.remsi %4, %7 : vector<1x255xi32>
    %c0_i32_1 = arith.constant 0 : i32
    %9 = vector.broadcast %c0_i32_1 : i32 to vector<1x255xi32>
    %10 = arith.cmpi ne, %8, %9 : vector<1x255xi32>
    %c0_i32_2 = arith.constant 0 : i32
    %11 = vector.broadcast %c0_i32_2 : i32 to vector<1x255xi32>
    %12 = arith.cmpi slt, %8, %11 : vector<1x255xi32>
    %c0_i32_3 = arith.constant 0 : i32
    %13 = arith.cmpi slt, %6, %c0_i32_3 : i32
    %14 = vector.broadcast %13 : i1 to vector<1x255xi1>
    %15 = vector.broadcast %14 : vector<1x255xi1> to vector<1x255xi1>
    %16 = arith.xori %12, %15 : vector<1x255xi1>
    %17 = arith.andi %16, %10 : vector<1x255xi1>
    %18 = vector.broadcast %6 : i32 to vector<1x255xi32>
    %19 = arith.addi %8, %18 : vector<1x255xi32>
    %20 = arith.select %17, %19, %8 : vector<1x255xi1>, vector<1x255xi32>
    %c15_i32 = arith.constant 15 : i32
    %21 = vector.broadcast %c15_i32 : i32 to vector<1x255xi32>
    %22 = arith.cmpi ne, %20, %21 : vector<1x255xi32>
    %23 = arith.mulf %3, %3 : vector<8x255xf32>
    %cst = arith.constant 0.000000e+00 : f32
    %24 = vector.shape_cast %22 : vector<1x255xi1> to vector<1x255xi1>
    %25 = vector.broadcast %24 : vector<1x255xi1> to vector<8x255xi1>
    %26 = vector.broadcast %cst : f32 to vector<8x255xf32>
    %27 = arith.select %25, %23, %26 : vector<8x255xi1>, vector<8x255xf32>
    %28 = vector.shape_cast %27 : vector<8x255xf32> to vector<1x8x255xf32>
    %cst_4 = arith.constant dense<0.000000e+00> : vector<1xf32>
    %29 = vector.multi_reduction <add>, %28, %cst_4 [1, 2] : vector<1x8x255xf32> to vector<1xf32>
    %30 = vector.shape_cast %29 : vector<1xf32> to vector<1x1x1xf32>
    %31 = vector.extract %30[0, 0, 0] : f32 from vector<1x1x1xf32>
    %32 = vector.broadcast %31 : f32 to vector<1x1xf32>
    %33 = vector.extract_strided_slice %0 {offsets = [0, 16], sizes = [8, 240], strides = [1, 1]} : vector<8x256xf32> to vector<8x240xf32>
    %34 = vector.extract_strided_slice %0 {offsets = [0, 0], sizes = [8, 240], strides = [1, 1]} : vector<8x256xf32> to vector<8x240xf32>
    %35 = arith.subf %33, %34 : vector<8x240xf32>
    %36 = arith.mulf %35, %35 : vector<8x240xf32>
    %37 = vector.shape_cast %36 : vector<8x240xf32> to vector<1x8x240xf32>
    %cst_5 = arith.constant dense<0.000000e+00> : vector<1xf32>
    %38 = vector.multi_reduction <add>, %37, %cst_5 [1, 2] : vector<1x8x240xf32> to vector<1xf32>
    %39 = vector.shape_cast %38 : vector<1xf32> to vector<1x1x1xf32>
    %40 = vector.extract %39[0, 0, 0] : f32 from vector<1x1x1xf32>
    %41 = vector.broadcast %40 : f32 to vector<1x1xf32>
    %42 = tpu.iota {dimensions = array<i32: 1>} : vector<1x2xi32>
    %c0_i32_6 = arith.constant 0 : i32
    %43 = vector.broadcast %c0_i32_6 : i32 to vector<1x2xi32>
    %44 = arith.cmpi eq, %42, %43 : vector<1x2xi32>
    %45 = vector.shape_cast %41 : vector<1x1xf32> to vector<1x1xf32>
    %46 = vector.broadcast %45 : vector<1x1xf32> to vector<1x2xf32>
    %47 = vector.shape_cast %32 : vector<1x1xf32> to vector<1x1xf32>
    %48 = vector.broadcast %47 : vector<1x1xf32> to vector<1x2xf32>
    %49 = arith.select %44, %46, %48 : vector<1x2xi1>, vector<1x2xf32>
    %c0_7 = arith.constant 0 : index
    %c0_8 = arith.constant 0 : index
    %c0_9 = arith.constant 0 : index
    %50 = vector.load %arg2[%c0_7, %c0_8, %c0_9] : memref<1x1x2xf32, #tpu.memory_space<vmem>>, vector<1x1x2xf32>
    %51 = vector.shape_cast %50 : vector<1x1x2xf32> to vector<1x2xf32>
    %52 = vector.shape_cast %49 : vector<1x2xf32> to vector<1x1x2xf32>
    tpu.vector_store %arg2[%c0_7, %c0_8, %c0_9], %52 {strides = array<i32>} : memref<1x1x2xf32, #tpu.memory_space<vmem>>, vector<1x1x2xf32>,
    return
  }
  func.func @transform_0(%arg0: i32) -> (i32, i32) {
    %c0_i32 = arith.constant 0 : i32
    %c0_i32_0 = arith.constant 0 : i32
    return %arg0, %c0_i32 : i32, i32
  }
  func.func @transform_1(%arg0: i32) -> (i32, i32, i32) {
    %c0_i32 = arith.constant 0 : i32
    %c0_i32_0 = arith.constant 0 : i32
    %c0_i32_1 = arith.constant 0 : i32
    return %arg0, %c0_i32, %c0_i32_0 : i32, i32, i32
  }
}

</mosaic_0001>

<llo_original>
// kernel: tpu_custom_call.1
$region0: #{tpu_custom_call.1}
  #allocation0 [shape = 'u32[]', space=smem, size = 0x4, offset = 0x4, fixed_abs, tag = 'smem constant byte address 0x4 - core index']
  #allocation1 [shape = 'u32[144,128]{1,0:T(1,128)}', space=vmem, size = 0x12000, scoped, tag = 'internal scratch']
  %s0 = inlined_call_operand.hbm [shape: f32[8,256], index: 0, kind: input, shape index: {}]
  %s1 = inlined_call_operand.hbm [shape: f32[1,1,2], index: 1, kind: output, shape index: {}]
  %s2 = sld [smem:[#allocation0]]
  $region18: #{tpu_custom_call.1} parent=0
    _
  %s4 = ssub.s32 1, %s2
  %s5 = scalar_select 0, %s4, %s2
  $region1: #{tpu_custom_call.1} parent=0
    #allocation2 [shape = 'u8[8192]{0}', space=vmem, size = 0x2000, scoped, tag = 'input window, operand 0, single buffered']
    #allocation3 [shape = 's32[1]{0}', space=sflag, size = 0x4, scoped, tag = 'scoped memory for tpu_custom_call.1']
    #allocation4 [shape = 's32[1]{0}', space=sflag, size = 0x4, scoped, tag = 'scoped memory for tpu_custom_call.1']
    #allocation5 [shape = 'u8[512]{0}', space=vmem, size = 0x400, scoped, tag = 'output window, operand 0, single buffered']
    %6 = vsyncpa [#allocation3], 0
    %7 = vsyncpa [#allocation4], 0
    // Predicated region
    $region2: #{tpu_custom_call.1} parent=1 // pred_check
      _
    $region3: #{tpu_custom_call.1} parent=1 // pred_check_branch
      %9 = sbr.rel (0) target = $region5
    $region4: #{tpu_custom_call.1} parent=1 // pred_region
      %s11 = ssub.s32 256, 256
      %12 = vsyncadd [#allocation3], %s11
      %s14 = sshll.u32 [#allocation2], 4
      %s15 = int_to_ptr.vmem [resolvable:$true] %s14
      %17 = dma.hbm_to_vmem [thread:$0]  %s0, 256, %s15, [#allocation3]
    $region5: #{tpu_custom_call.1} parent=1 // pred_fallthru
      _
    // Predicated region
    $region6: #{tpu_custom_call.1} parent=1 // pred_check
      _
    $region7: #{tpu_custom_call.1} parent=1 // pred_check_branch
      %19 = sbr.rel (0) target = $region9
    $region8: #{tpu_custom_call.1} parent=1 // pred_region
      %20 = dma.done [#allocation3], 256
    $region9: #{tpu_custom_call.1} parent=1 // pred_fallthru
      _
    %v21 = vld [vmem:[#allocation2] sm:$0xff]
    %v22 = vld [vmem:[#allocation2 + $0x8] sm:$0xff]
    %25 = vrot.lane.b32.xlu0 %v21, 1
    %v26 = vpop.permute.xlu0 %25
    %27 = vrot.lane.b32.xlu0 %v22, 1
    %v28 = vpop.permute.xlu0 %27
    %vm29 = vcmask 7168
    %v30 = vsel %vm29, %v26, %v28
    %v33 = vsub.f32 %v21, %v26
    %v34 = vsub.f32 %v22, %v30
    %v35 = vlaneseq
    %v36 = vand.u32 %v35, 127
    %v37 = vadd.s32 %v36, 128
    %vm38 = vcmp.lt.s32.totalorder %v36, 0
    %v39 = vsub.s32 0, %v36
    %v40 = vsel %vm38, %v39, %v36
    %v41 = vshrl.u32 %v40, 4
    %v42 = vand.u32 %v40, 15
    %v43 = vsub.s32 0, %v42
    %v44 = vsel %vm38, %v43, %v42
    %vm45 = vcmp.lt.s32.totalorder %v37, 0
    %v46 = vsub.s32 0, %v37
    %v47 = vsel %vm45, %v46, %v37
    %v48 = vshrl.u32 %v47, 4
    %v49 = vand.u32 %v47, 15
    %v50 = vsub.s32 0, %v49
    %v51 = vsel %vm45, %v50, %v49
    %vm52 = vcmp.ne.s32.totalorder %v44, 0
    %vm53 = vcmp.ne.s32.totalorder %v51, 0
    %vm54 = vcmp.lt.s32.totalorder %v44, 0
    %vm55 = vcmp.lt.s32.totalorder %v51, 0
    %vm56 = vmand %vm54, %vm52
    %vm57 = vmand %vm55, %vm53
    %v58 = vadd.s32 %v44, 16
    %v59 = vadd.s32 %v51, 16
    %v60 = vsel %vm56, %v58, %v44
    %v61 = vsel %vm57, %v59, %v51
    %vm62 = vcmp.ne.s32.totalorder %v60, 15
    %vm63 = vcmp.ne.s32.totalorder %v61, 15
    %v64 = vmul.f32 %v33, %v33
    %v65 = vmul.f32 %v34, %v34
    %v66 = vsel %vm62, 1, 0
    %v67 = vsel %vm63, 1, 0
    %vm68 = vcmp.eq.s32.totalorder %v66, 1
    %vm69 = vcmp.eq.s32.totalorder %v67, 1
    %72 = vrot.lane.b32.xlu0 %v64, 127
    %v73 = vpop.permute.xlu0 %72
    %74 = vrot.lane.b32.xlu0 %v65, 127
    %v75 = vpop.permute.xlu0 %74
    %vm76 = vcmask 1039360
    %v77 = vsel %vm76, %v73, %v75
    %v80 = vsel %vm68, %v77, 0.0
    %v81 = vsel %vm69, %v75, 0.0
    %v82 = vsel %vm76, %v81, 0.0
    %v83 = vadd.f32 %v80, %v82
    %84 = vadd.xlane.f32.xlu0 %v83
    %v85 = vpop.xlane.xlu0 %84
    %v86 = vrot.slane %v85, 4
    %v87 = vadd.f32 %v85, %v86
    %v88 = vrot.slane %v87, 2
    %v89 = vadd.f32 %v87, %v88
    %v90 = vrot.slane %v89, 1
    %v91 = vadd.f32 %v89, %v90
    %s92 = vtos %v91
    %93 = vrot.lane.b32.xlu0 %v21, 16
    %v94 = vpop.permute.xlu0 %93
    %95 = vrot.lane.b32.xlu0 %v22, 16
    %v96 = vpop.permute.xlu0 %95
    %vm97 = vcmask 130048
    %v98 = vsel %vm97, %v94, %v96
    %v101 = vsub.f32 %v21, %v94
    %v102 = vsub.f32 %v22, %v98
    %v103 = vmul.f32 %v101, %v101
    %v104 = vmul.f32 %v102, %v102
    %107 = vrot.lane.b32.xlu0 %v103, 112
    %v108 = vpop.permute.xlu0 %107
    %109 = vrot.lane.b32.xlu0 %v104, 112
    %v110 = vpop.permute.xlu0 %109
    %vm111 = vcmask 916480
    %v112 = vsel %vm111, %v108, %v110
    %v115 = vsel %vm111, %v110, 0.0
    %v116 = vadd.f32 %v112, %v115
    %117 = vadd.xlane.f32.xlu0 %v116
    %v118 = vpop.xlane.xlu0 %117
    %v119 = vrot.slane %v118, 4
    %v120 = vadd.f32 %v118, %v119
    %v121 = vrot.slane %v120, 2
    %v122 = vadd.f32 %v120, %v121
    %v123 = vrot.slane %v122, 1
    %v124 = vadd.f32 %v122, %v123
    %s125 = vtos %v124
    %vm126 = vcmp.eq.s32.totalorder %v36, 0
    %v127 = vstv %s125
    %v128 = vstv %s92
    %v129 = vsel %vm126, %v127, %v128
    %vm130 = vcmask 8192
    %131 = vst.msk [vmem:[#allocation5] sm:$0x1] %vm130, %v129
    // Predicated region
    $region10: #{tpu_custom_call.1} parent=1 // pred_check
      _
    $region11: #{tpu_custom_call.1} parent=1 // pred_check_branch
      %133 = sbr.rel (0) target = $region13
    $region12: #{tpu_custom_call.1} parent=1 // pred_region
      %s135 = ssub.s32 16, 16
      %136 = vsyncadd [#allocation4], %s135
      %s138 = sshll.u32 [#allocation5], 4
      %s139 = int_to_ptr.vmem [resolvable:$true] %s138
      %141 = dma.vmem_to_hbm [thread:$0]  %s139, 16, %s1, [#allocation4]
    $region13: #{tpu_custom_call.1} parent=1 // pred_fallthru
      _
    // Predicated region
    $region14: #{tpu_custom_call.1} parent=1 // pred_check
      _
    $region15: #{tpu_custom_call.1} parent=1 // pred_check_branch
      %143 = sbr.rel (0) target = $region17
    $region16: #{tpu_custom_call.1} parent=1 // pred_region
      %144 = dma.done [#allocation4], 16
    $region17: #{tpu_custom_call.1} parent=1 // pred_fallthru
      _
    %145 = vsyncpa [#allocation3], 1
    %146 = vsyncpa [#allocation4], 1

</llo_original>
